<compile_context>
chip_gen: v5e
topology: v5e:2x2
jax: 0.10.0
libtpu: 0.0.40
codegen_flags: <defaults>
</compile_context>

<pallas_src>
import jax
import jax.numpy as jnp
from jax.experimental import pallas as pl
from jax.experimental.pallas import tpu as pltpu


def _round_up(v: int, m: int) -> int:
    return ((v + m - 1) // m) * m


def lora_linear_kernel(x_ref, w_ref, b_ref, a_ref, bB_ref, o_ref, acc_ref, ax_ref):
    # Grid: (i over M tiles, j over N tiles, k over K tiles); K is innermost.
    # x_ref:  (tm, tk)   input row tile
    # w_ref:  (tk, tn)   base weight, already transposed to (K, N)
    # b_ref:  (1, tn)    bias tile
    # a_ref:  (tk, r)    lora_A, already transposed to (K, r)
    # bB_ref: (r, tn)    scaling * lora_B, already transposed to (r, N)
    # acc_ref: (tm, tn) f32 accumulator for x @ W
    # ax_ref:  (tm, r)  f32 accumulator for x @ A
    k = pl.program_id(2)

    @pl.when(k == 0)
    def _init():
        acc_ref[...] = jnp.zeros_like(acc_ref)
        ax_ref[...] = jnp.zeros_like(ax_ref)

    x = x_ref[...]
    acc_ref[...] += jnp.dot(x, w_ref[...], preferred_element_type=jnp.float32)
    ax_ref[...] += jnp.dot(x, a_ref[...], preferred_element_type=jnp.float32)

    @pl.when(k == pl.num_programs(2) - 1)
    def _finalize():
        lora = jnp.dot(ax_ref[...], bB_ref[...].astype(jnp.float32),
                       preferred_element_type=jnp.float32)
        out = acc_ref[...] + b_ref[...].astype(jnp.float32) + lora
        o_ref[...] = out.astype(o_ref.dtype)


def lora_linear(x, w_base, b_base, lora_A, lora_B, scaling,
                *, tm=256, tn=256, tk=256, use_bf16_matmul=False):
    """LoRA Linear forward. x: (..., in_features) -> (..., out_features).

    w_base: (out_f, in_f)  PyTorch nn.Linear weight layout
    b_base: (out_f,)
    lora_A: (r, in_f), lora_B: (out_f, r)
    """
    out_f, in_f = w_base.shape
    r = lora_A.shape[0]
    orig_shape = x.shape
    out_dtype = x.dtype

    x2 = x.reshape(-1, in_f)
    M = x2.shape[0]

    # Clamp tiles to (padded) problem size; keep MXU/lane alignment.
    tm = min(tm, _round_up(M, 8))
    tn = min(tn, _round_up(out_f, 128))
    tk = min(tk, _round_up(in_f, 128))

    Mp = _round_up(M, tm)
    Np = _round_up(out_f, tn)
    Kp = _round_up(in_f, tk)

    # One-time wrapper-side layout prep (pre-transpose, fold scaling, zero-pad).
    x_p = jnp.pad(x2, ((0, Mp - M), (0, Kp - in_f)))
    w_t = jnp.pad(w_base.T, ((0, Kp - in_f), (0, Np - out_f)))            # (Kp, Np)
    b_p = jnp.pad(b_base.reshape(1, out_f), ((0, 0), (0, Np - out_f)))    # (1, Np)
    a_t = jnp.pad(lora_A.T, ((0, Kp - in_f), (0, 0)))                     # (Kp, r)
    bB_t = jnp.pad((scaling * lora_B).T, ((0, 0), (0, Np - out_f)))       # (r, Np)

    if use_bf16_matmul:
        # MXU is a bf16 engine; f32 matmuls decompose into multiple passes.
        x_p = x_p.astype(jnp.bfloat16)
        w_t = w_t.astype(jnp.bfloat16)
        a_t = a_t.astype(jnp.bfloat16)
        bB_t = bB_t.astype(jnp.bfloat16)

    in_bytes = jnp.dtype(x_p.dtype).itemsize
    out_bytes = jnp.dtype(out_dtype).itemsize
    # Double-buffered inputs/outputs + f32 scratch, with margin.
    vmem_need = (2 * in_bytes * (tm * tk + tk * tn + tn + tk * r + r * tn)
                 + 2 * out_bytes * (tm * tn)
                 + 4 * (tm * tn + tm * r))
    vmem_limit = min(max(2 * vmem_need, 8 << 20), 64 << 20)

    grid = (Mp // tm, Np // tn, Kp // tk)

    out = pl.pallas_call(
        lora_linear_kernel,
        out_shape=jax.ShapeDtypeStruct((Mp, Np), out_dtype),
        grid_spec=pltpu.PrefetchScalarGridSpec(
            num_scalar_prefetch=0,
            grid=grid,
            in_specs=[
                pl.BlockSpec((tm, tk), lambda i, j, k: (i, k)),   # x tile
                pl.BlockSpec((tk, tn), lambda i, j, k: (k, j)),   # W (K,N) tile
                pl.BlockSpec((1, tn), lambda i, j, k: (0, j)),    # bias tile
                pl.BlockSpec((tk, r), lambda i, j, k: (k, 0)),    # lora_A (K,r)
                pl.BlockSpec((r, tn), lambda i, j, k: (0, j)),    # scaled lora_B (r,N)
            ],
            out_specs=pl.BlockSpec((tm, tn), lambda i, j, k: (i, j)),
            scratch_shapes=[
                pltpu.VMEM((tm, tn), jnp.float32),
                pltpu.VMEM((tm, r), jnp.float32),
            ],
        ),
        compiler_params=pltpu.CompilerParams(
            dimension_semantics=("parallel", "parallel", "arbitrary"),
            vmem_limit_bytes=int(vmem_limit),
        ),
    )(x_p, w_t, b_p, a_t, bB_t)

    out = out[:M, :out_f]
    return out.reshape(*orig_shape[:-1], out_f)


if __name__ == "__main__":
    # Small shapes consistent with the module: nn.Linear base layer.
    batch, seq = 2, 8
    in_features, out_features = 32, 32
    r, lora_alpha = 4, 8
    scaling = lora_alpha / r  # 2.0
    # lora_dropout = 0.0 -> Identity (no dropout at forward)

    key = jax.random.PRNGKey(0)
    kx, kw, kb, ka, kbB = jax.random.split(key, 5)

    x = jax.random.normal(kx, (batch, seq, in_features), dtype=jnp.float32)
    # Base nn.Linear params (weight: out x in, bias: out) — deterministic init.
    w_base = jax.random.normal(kw, (out_features, in_features), dtype=jnp.float32) * 0.1
    b_base = jax.random.normal(kb, (out_features,), dtype=jnp.float32) * 0.1
    # LoRA adapter params (lora_A: r x in, lora_B: out x r).
    # NOTE: the module inits lora_B to zeros (kaiming for lora_A); we use nonzero
    # deterministic values so the LoRA path is exercised — semantics identical.
    lora_A = jax.random.normal(ka, (r, in_features), dtype=jnp.float32) * 0.1
    lora_B = jax.random.normal(kbB, (out_features, r), dtype=jnp.float32) * 0.1

    y = lora_linear(x, w_base, b_base, lora_A, lora_B, scaling)
    y = jax.block_until_ready(y)

    # Pure-JAX reference check of the exact forward semantics.
    ref = (jnp.einsum("bsi,oi->bso", x, w_base) + b_base
           + scaling * jnp.einsum("bsr,or->bso",
                                  jnp.einsum("bsi,ri->bsr", x, lora_A), lora_B))
    assert y.shape == (batch, seq, out_features)
    assert jnp.allclose(y, ref, atol=1e-4, rtol=1e-4), "mismatch vs reference"

    print("KERNEL_OK")
</pallas_src>

<mosaic_0001>
module attributes {stable_mosaic.version = 11 : i64} {
  func.func @lora_linear_kernel(%arg0: i32, %arg1: i32, %arg2: i32, %arg3: memref<16x128xf32, #tpu.memory_space<vmem>>, %arg4: memref<128x128xf32, #tpu.memory_space<vmem>>, %arg5: memref<1x128xf32, #tpu.memory_space<vmem>>, %arg6: memref<128x4xf32, #tpu.memory_space<vmem>>, %arg7: memref<4x128xf32, #tpu.memory_space<vmem>>, %arg8: memref<16x128xf32, #tpu.memory_space<vmem>>, %arg9: memref<16x128xf32, #tpu.memory_space<vmem>>, %arg10: memref<16x4xf32, #tpu.memory_space<vmem>>) attributes {dimension_semantics = [#tpu.dimension_semantics<parallel>, #tpu.dimension_semantics<parallel>, #tpu.dimension_semantics<arbitrary>], iteration_bounds = array<i64: 1, 1, 1>, scalar_prefetch = 0 : i64, scratch_operands = 2 : i64, tpu.core_type = #tpu.core_type<tc>, window_params = [{transform_indices = @transform_0, window_bounds = array<i64: 16, 128>}, {transform_indices = @transform_1, window_bounds = array<i64: 128, 128>}, {transform_indices = @transform_2, window_bounds = array<i64: 1, 128>}, {transform_indices = @transform_3, window_bounds = array<i64: 128, 4>}, {transform_indices = @transform_4, window_bounds = array<i64: 4, 128>}, {transform_indices = @transform_5, window_bounds = array<i64: 16, 128>}]} {
    %c0_i32 = arith.constant 0 : i32
    %0 = arith.cmpi eq, %arg2, %c0_i32 : i32
    %1 = arith.extui %0 : i1 to i32
    %c0_i32_0 = arith.constant 0 : i32
    %2 = arith.cmpi ne, %1, %c0_i32_0 : i32
    scf.if %2 {
      %cst_17 = arith.constant 0.000000e+00 : f32
      %17 = vector.broadcast %cst_17 : f32 to vector<16x128xf32>
      %c0_18 = arith.constant 0 : index
      %c0_19 = arith.constant 0 : index
      %18 = vector.load %arg9[%c0_18, %c0_19] : memref<16x128xf32, #tpu.memory_space<vmem>>, vector<16x128xf32>
      tpu.vector_store %arg9[%c0_18, %c0_19], %17 {strides = array<i32>} : memref<16x128xf32, #tpu.memory_space<vmem>>, vector<16x128xf32>,
      %cst_20 = arith.constant 0.000000e+00 : f32
      %19 = vector.broadcast %cst_20 : f32 to vector<16x4xf32>
      %c0_21 = arith.constant 0 : index
      %c0_22 = arith.constant 0 : index
      %20 = vector.load %arg10[%c0_21, %c0_22] : memref<16x4xf32, #tpu.memory_space<vmem>>, vector<16x4xf32>
      tpu.vector_store %arg10[%c0_21, %c0_22], %19 {strides = array<i32>} : memref<16x4xf32, #tpu.memory_space<vmem>>, vector<16x4xf32>,
    } else {
    }
    %c0 = arith.constant 0 : index
    %c0_1 = arith.constant 0 : index
    %3 = vector.load %arg3[%c0, %c0_1] : memref<16x128xf32, #tpu.memory_space<vmem>>, vector<16x128xf32>
    %c0_2 = arith.constant 0 : index
    %c0_3 = arith.constant 0 : index
    %4 = vector.load %arg9[%c0_2, %c0_3] : memref<16x128xf32, #tpu.memory_space<vmem>>, vector<16x128xf32>
    %c0_4 = arith.constant 0 : index
    %c0_5 = arith.constant 0 : index
    %5 = vector.load %arg4[%c0_4, %c0_5] : memref<128x128xf32, #tpu.memory_space<vmem>>, vector<128x128xf32>
    %cst = arith.constant dense<0.000000e+00> : vector<16x128xf32>
    %6 = tpu.matmul %3, %5, %cst {dimension_numbers = #tpu.dot_dimension_numbers<[1], [0], [0], [1], [0, 0, 1, 1], [], []>} : vector<16x128xf32>, vector<128x128xf32>, vector<16x128xf32> -> vector<16x128xf32>
    %7 = arith.addf %4, %6 : vector<16x128xf32>
    %c0_6 = arith.constant 0 : index
    %c0_7 = arith.constant 0 : index
    %8 = vector.load %arg9[%c0_6, %c0_7] : memref<16x128xf32, #tpu.memory_space<vmem>>, vector<16x128xf32>
    tpu.vector_store %arg9[%c0_6, %c0_7], %7 {strides = array<i32>} : memref<16x128xf32, #tpu.memory_space<vmem>>, vector<16x128xf32>,
    %c0_8 = arith.constant 0 : index
    %c0_9 = arith.constant 0 : index
    %9 = vector.load %arg10[%c0_8, %c0_9] : memref<16x4xf32, #tpu.memory_space<vmem>>, vector<16x4xf32>
    %c0_10 = arith.constant 0 : index
    %c0_11 = arith.constant 0 : index
    %10 = vector.load %arg6[%c0_10, %c0_11] : memref<128x4xf32, #tpu.memory_space<vmem>>, vector<128x4xf32>
    %cst_12 = arith.constant dense<0.000000e+00> : vector<16x4xf32>
    %11 = tpu.matmul %3, %10, %cst_12 {dimension_numbers = #tpu.dot_dimension_numbers<[1], [0], [0], [1], [0, 0, 1, 1], [], []>} : vector<16x128xf32>, vector<128x4xf32>, vector<16x4xf32> -> vector<16x4xf32>
    %12 = arith.addf %9, %11 : vector<16x4xf32>
    %c0_13 = arith.constant 0 : index
    %c0_14 = arith.constant 0 : index
    %13 = vector.load %arg10[%c0_13, %c0_14] : memref<16x4xf32, #tpu.memory_space<vmem>>, vector<16x4xf32>
    tpu.vector_store %arg10[%c0_13, %c0_14], %12 {strides = array<i32>} : memref<16x4xf32, #tpu.memory_space<vmem>>, vector<16x4xf32>,
    %c0_i32_15 = arith.constant 0 : i32
    %14 = arith.cmpi eq, %arg2, %c0_i32_15 : i32
    %15 = arith.extui %14 : i1 to i32
    %c0_i32_16 = arith.constant 0 : i32
    %16 = arith.cmpi ne, %15, %c0_i32_16 : i32
    scf.if %16 {
      %c0_17 = arith.constant 0 : index
      %c0_18 = arith.constant 0 : index
      %17 = vector.load %arg10[%c0_17, %c0_18] : memref<16x4xf32, #tpu.memory_space<vmem>>, vector<16x4xf32>
      %c0_19 = arith.constant 0 : index
      %c0_20 = arith.constant 0 : index
      %18 = vector.load %arg7[%c0_19, %c0_20] : memref<4x128xf32, #tpu.memory_space<vmem>>, vector<4x128xf32>
      %cst_21 = arith.constant dense<0.000000e+00> : vector<16x128xf32>
      %19 = tpu.matmul %17, %18, %cst_21 {dimension_numbers = #tpu.dot_dimension_numbers<[1], [0], [0], [1], [0, 0, 1, 1], [], []>} : vector<16x4xf32>, vector<4x128xf32>, vector<16x128xf32> -> vector<16x128xf32>
      %c0_22 = arith.constant 0 : index
      %c0_23 = arith.constant 0 : index
      %20 = vector.load %arg9[%c0_22, %c0_23] : memref<16x128xf32, #tpu.memory_space<vmem>>, vector<16x128xf32>
      %c0_24 = arith.constant 0 : index
      %c0_25 = arith.constant 0 : index
      %21 = vector.load %arg5[%c0_24, %c0_25] : memref<1x128xf32, #tpu.memory_space<vmem>>, vector<1x128xf32>
      %22 = vector.broadcast %21 : vector<1x128xf32> to vector<16x128xf32>
      %23 = arith.addf %20, %22 : vector<16x128xf32>
      %24 = arith.addf %23, %19 : vector<16x128xf32>
      %c0_26 = arith.constant 0 : index
      %c0_27 = arith.constant 0 : index
      %25 = vector.load %arg8[%c0_26, %c0_27] : memref<16x128xf32, #tpu.memory_space<vmem>>, vector<16x128xf32>
      tpu.vector_store %arg8[%c0_26, %c0_27], %24 {strides = array<i32>} : memref<16x128xf32, #tpu.memory_space<vmem>>, vector<16x128xf32>,
    } else {
    }
    return
  }
  func.func @transform_0(%arg0: i32, %arg1: i32, %arg2: i32) -> (i32, i32) {
    %c0_i32 = arith.constant 0 : i32
    return %arg0, %arg2 : i32, i32
  }
  func.func @transform_1(%arg0: i32, %arg1: i32, %arg2: i32) -> (i32, i32) {
    %c0_i32 = arith.constant 0 : i32
    return %arg2, %arg1 : i32, i32
  }
  func.func @transform_2(%arg0: i32, %arg1: i32, %arg2: i32) -> (i32, i32) {
    %c0_i32 = arith.constant 0 : i32
    %c0_i32_0 = arith.constant 0 : i32
    return %c0_i32, %arg1 : i32, i32
  }
  func.func @transform_3(%arg0: i32, %arg1: i32, %arg2: i32) -> (i32, i32) {
    %c0_i32 = arith.constant 0 : i32
    %c0_i32_0 = arith.constant 0 : i32
    return %arg2, %c0_i32 : i32, i32
  }
  func.func @transform_4(%arg0: i32, %arg1: i32, %arg2: i32) -> (i32, i32) {
    %c0_i32 = arith.constant 0 : i32
    %c0_i32_0 = arith.constant 0 : i32
    return %c0_i32, %arg1 : i32, i32
  }
  func.func @transform_5(%arg0: i32, %arg1: i32, %arg2: i32) -> (i32, i32) {
    %c0_i32 = arith.constant 0 : i32
    return %arg0, %arg1 : i32, i32
  }
}

</mosaic_0001>

<llo_original>
// kernel: tpu_custom_call.1
$region0: #{tpu_custom_call.1}
  #allocation0 [shape = 'u32[]', space=smem, size = 0x4, offset = 0x4, fixed_abs, tag = 'smem constant byte address 0x4 - core index']
  #allocation1 [shape = 'u32[72,128]{1,0:T(1,128)}', space=vmem, size = 0x9000, scoped, tag = 'internal scratch']
  #allocation2 [shape = 'f32[16,128]{1,0:T(8,128)}', space=vmem, size = 0x2000, scoped, tag = 'scratch operand']
  #allocation3 [shape = 'f32[16,4]{1,0:T(8,128)}', space=vmem, size = 0x2000, scoped, tag = 'scratch operand']
  %s0 = inlined_call_operand.hbm [shape: f32[16,128], index: 0, kind: input, shape index: {}]
  %s1 = inlined_call_operand.vmem [shape: f32[128,128], index: 1, kind: input, shape index: {}]
  %s2 = inlined_call_operand.vmem [shape: f32[1,128], index: 2, kind: input, shape index: {}]
  %s3 = inlined_call_operand.vmem [shape: f32[128,4], index: 3, kind: input, shape index: {}]
  %s4 = inlined_call_operand.vmem [shape: f32[4,128], index: 4, kind: input, shape index: {}]
  %s5 = inlined_call_operand.hbm [shape: f32[16,128], index: 5, kind: output, shape index: {}]
  %s6 = sld [smem:[#allocation0]]
  $region42: #{tpu_custom_call.1} parent=0
    _
  %s8 = ssub.s32 1, %s6
  %s9 = scalar_select 0, %s8, %s6
  $region1: #{tpu_custom_call.1} parent=0
    #allocation4 [shape = 'u8[8192]{0}', space=vmem, size = 0x2000, scoped, tag = 'input window, operand 0, single buffered']
    #allocation5 [shape = 's32[1]{0}', space=sflag, size = 0x4, scoped, tag = 'scoped memory for tpu_custom_call.1']
    #allocation6 [shape = 's32[1]{0}', space=sflag, size = 0x4, scoped, tag = 'scoped memory for tpu_custom_call.1']
    #allocation7 [shape = 'u8[8192]{0}', space=vmem, size = 0x2000, scoped, tag = 'output window, operand 0, single buffered']
    %10 = vsyncpa [#allocation5], 0
    %11 = vsyncpa [#allocation6], 0
    // Predicated region
    $region2: #{tpu_custom_call.1} parent=1 // pred_check
      _
    $region3: #{tpu_custom_call.1} parent=1 // pred_check_branch
      %13 = sbr.rel (0) target = $region5
    $region4: #{tpu_custom_call.1} parent=1 // pred_region
      %15 = vsyncadd [#allocation5], 0
      %s16 = sshll.u32 %s0, 4
      %s17 = int_to_ptr.hbm [resolvable:$true] %s16
      %s18 = sshll.u32 [#allocation4], 4
      %s19 = int_to_ptr.vmem [resolvable:$true] %s18
      %24 = dma.hbm_to_vmem [thread:$0]  %s17, 256, %s19, [#allocation5], 128, 128, 8
    $region5: #{tpu_custom_call.1} parent=1 // pred_fallthru
      _
    // Predicated region
    $region6: #{tpu_custom_call.1} parent=1 // pred_check
      _
    $region7: #{tpu_custom_call.1} parent=1 // pred_check_branch
      %26 = sbr.rel (0) target = $region9
    $region8: #{tpu_custom_call.1} parent=1 // pred_region
      _
    $region9: #{tpu_custom_call.1} parent=1 // pred_fallthru
      _
    // Predicated region
    $region10: #{tpu_custom_call.1} parent=1 // pred_check
      _
    $region11: #{tpu_custom_call.1} parent=1 // pred_check_branch
      %28 = sbr.rel (0) target = $region13
    $region12: #{tpu_custom_call.1} parent=1 // pred_region
      _
    $region13: #{tpu_custom_call.1} parent=1 // pred_fallthru
      _
    // Predicated region
    $region14: #{tpu_custom_call.1} parent=1 // pred_check
      _
    $region15: #{tpu_custom_call.1} parent=1 // pred_check_branch
      %30 = sbr.rel (0) target = $region17
    $region16: #{tpu_custom_call.1} parent=1 // pred_region
      _
    $region17: #{tpu_custom_call.1} parent=1 // pred_fallthru
      _
    // Predicated region
    $region18: #{tpu_custom_call.1} parent=1 // pred_check
      _
    $region19: #{tpu_custom_call.1} parent=1 // pred_check_branch
      %32 = sbr.rel (0) target = $region21
    $region20: #{tpu_custom_call.1} parent=1 // pred_region
      _
    $region21: #{tpu_custom_call.1} parent=1 // pred_fallthru
      _
    // Predicated region
    $region22: #{tpu_custom_call.1} parent=1 // pred_check
      _
    $region23: #{tpu_custom_call.1} parent=1 // pred_check_branch
      %34 = sbr.rel (0) target = $region25
    $region24: #{tpu_custom_call.1} parent=1 // pred_region
      %36 = dma.done [#allocation5], 256
    $region25: #{tpu_custom_call.1} parent=1 // pred_fallthru
      _
    %p37 = scmp.eq.s32.totalorder 0, 0
    // Predicated region
    $region26: #{tpu_custom_call.1} parent=1 // pred_check
      %p38 = pneg %p37
    $region27: #{tpu_custom_call.1} parent=1 // pred_check_branch
      %40 = sbr.rel (%p38) target = $region29
    $region28: #{tpu_custom_call.1} parent=1 // pred_region
      %41 = vst [vmem:[#allocation2] sm:$0xff] 0.0
      %42 = vst [vmem:[#allocation2 + $0x8] sm:$0xff] 0.0
      %vm43 = vcmask 31744
      %44 = vst.msk [vmem:[#allocation3] sm:$0xff] %vm43, 0.0
      %45 = vst.msk [vmem:[#allocation3 + $0x8] sm:$0xff] %vm43, 0.0
    $region29: #{tpu_custom_call.1} parent=1 // pred_fallthru
      _
    %v46 = vld [vmem:[#allocation4] sm:$0xff]
    %v47 = vld [vmem:[#allocation4 + $0x8] sm:$0xff]
    %v48 = vld [vmem:[#allocation2] sm:$0xff]
    %v49 = vld [vmem:[#allocation2 + $0x8] sm:$0xff]
    %v50 = vld [vmem:[%s1] sm:$0xff]
    %v51 = vld [vmem:[%s1 + $0x8] sm:$0xff]
    %v52 = vld [vmem:[%s1 + $0x10] sm:$0xff]
    %v53 = vld [vmem:[%s1 + $0x18] sm:$0xff]
    %v54 = vld [vmem:[%s1 + $0x20] sm:$0xff]
    %v55 = vld [vmem:[%s1 + $0x28] sm:$0xff]
    %v56 = vld [vmem:[%s1 + $0x30] sm:$0xff]
    %v57 = vld [vmem:[%s1 + $0x38] sm:$0xff]
    %v58 = vld [vmem:[%s1 + $0x40] sm:$0xff]
    %v59 = vld [vmem:[%s1 + $0x48] sm:$0xff]
    %v60 = vld [vmem:[%s1 + $0x50] sm:$0xff]
    %v61 = vld [vmem:[%s1 + $0x58] sm:$0xff]
    %v62 = vld [vmem:[%s1 + $0x60] sm:$0xff]
    %v63 = vld [vmem:[%s1 + $0x68] sm:$0xff]
    %v64 = vld [vmem:[%s1 + $0x70] sm:$0xff]
    %v65 = vld [vmem:[%s1 + $0x78] sm:$0xff]
    %66 = vmatpush.msra.mxu0 %v65
    %67 = vmatpush.msra.mxu0 %v64
    %68 = vmatpush.msra.mxu0 %v63
    %69 = vmatpush.msra.mxu0 %v62
    %70 = vmatpush.msra.mxu0 %v61
    %71 = vmatpush.msra.mxu0 %v60
    %72 = vmatpush.msra.mxu0 %v59
    %73 = vmatpush.msra.mxu0 %v58
    %74 = vmatpush.msra.mxu0 %v57
    %75 = vmatpush.msra.mxu0 %v56
    %76 = vmatpush.msra.mxu0 %v55
    %77 = vmatpush.msra.mxu0 %v54
    %78 = vmatpush.msra.mxu0 %v53
    %79 = vmatpush.msra.mxu0 %v52
    %80 = vmatpush.msra.mxu0 %v51
    %81 = vmatpush.msra.mxu0 %v50
    %82 = vmatmul.f32.gmra.mxu0 %v46
    %v83 = vpop.f32.mrf.mxu0
    %v84 = vadd.f32 0.0, %v83
    %85 = vmatmul.f32.gmra.mxu0 %v47
    %v86 = vpop.f32.mrf.mxu0
    %v87 = vadd.f32 0.0, %v86
    %88 = vdwg.mxu0
    %v89 = vadd.f32 %v48, %v84
    %v90 = vadd.f32 %v49, %v87
    %91 = vst [vmem:[#allocation2] sm:$0xff] %v89
    %92 = vst [vmem:[#allocation2 + $0x8] sm:$0xff] %v90
    %v93 = vld [vmem:[#allocation3] sm:$0xff]
    %v94 = vld [vmem:[#allocation3 + $0x8] sm:$0xff]
    %v95 = vld [vmem:[%s3] sm:$0xff]
    %v96 = vld [vmem:[%s3 + $0x8] sm:$0xff]
    %v97 = vld [vmem:[%s3 + $0x10] sm:$0xff]
    %v98 = vld [vmem:[%s3 + $0x18] sm:$0xff]
    %v99 = vld [vmem:[%s3 + $0x20] sm:$0xff]
    %v100 = vld [vmem:[%s3 + $0x28] sm:$0xff]
    %v101 = vld [vmem:[%s3 + $0x30] sm:$0xff]
    %v102 = vld [vmem:[%s3 + $0x38] sm:$0xff]
    %v103 = vld [vmem:[%s3 + $0x40] sm:$0xff]
    %v104 = vld [vmem:[%s3 + $0x48] sm:$0xff]
    %v105 = vld [vmem:[%s3 + $0x50] sm:$0xff]
    %v106 = vld [vmem:[%s3 + $0x58] sm:$0xff]
    %v107 = vld [vmem:[%s3 + $0x60] sm:$0xff]
    %v108 = vld [vmem:[%s3 + $0x68] sm:$0xff]
    %v109 = vld [vmem:[%s3 + $0x70] sm:$0xff]
    %v110 = vld [vmem:[%s3 + $0x78] sm:$0xff]
    %111 = vmatpush.msra.mxu0 %v110
    %112 = vmatpush.msra.mxu0 %v109
    %113 = vmatpush.msra.mxu0 %v108
    %114 = vmatpush.msra.mxu0 %v107
    %115 = vmatpush.msra.mxu0 %v106
    %116 = vmatpush.msra.mxu0 %v105
    %117 = vmatpush.msra.mxu0 %v104
    %118 = vmatpush.msra.mxu0 %v103
    %119 = vmatpush.msra.mxu0 %v102
    %120 = vmatpush.msra.mxu0 %v101
    %121 = vmatpush.msra.mxu0 %v100
    %122 = vmatpush.msra.mxu0 %v99
    %123 = vmatpush.msra.mxu0 %v98
    %124 = vmatpush.msra.mxu0 %v97
    %125 = vmatpush.msra.mxu0 %v96
    %126 = vmatpush.msra.mxu0 %v95
    %127 = vmatmul.f32.gmra.mxu0 %v46
    %v128 = vpop.f32.mrf.mxu0
    %v129 = vadd.f32 0.0, %v128
    %130 = vmatmul.f32.gmra.mxu0 %v47
    %v131 = vpop.f32.mrf.mxu0
    %v132 = vadd.f32 0.0, %v131
    %133 = vdwg.mxu0
    %v134 = vadd.f32 %v93, %v129
    %v135 = vadd.f32 %v94, %v132
    %vm136 = vcmask 31744
    %137 = vst.msk [vmem:[#allocation3] sm:$0xff] %vm136, %v134
    %138 = vst.msk [vmem:[#allocation3 + $0x8] sm:$0xff] %vm136, %v135
    // Predicated region
    $region30: #{tpu_custom_call.1} parent=1 // pred_check
      %p139 = pneg %p37
    $region31: #{tpu_custom_call.1} parent=1 // pred_check_branch
      %141 = sbr.rel (%p139) target = $region33
    $region32: #{tpu_custom_call.1} parent=1 // pred_region
      %v142 = vld [vmem:[#allocation3] sm:$0xff]
      %v143 = vld [vmem:[#allocation3 + $0x8] sm:$0xff]
      %v144 = vld [vmem:[%s4] sm:$0xf]
      %v146 = vsel %vm136, %v142, 0
      %v149 = vsel %vm136, %v143, 0
      %vm151 = vcmask 1043456
      %v153 = vsel %vm151, %v144, 0
      %155 = vmatpush.msra.mxu0 0.0
      %156 = vmatpush.msra.mxu0 0.0
      %157 = vmatpush.msra.mxu0 0.0
      %158 = vmatpush.msra.mxu0 0.0
      %159 = vmatpush.msra.mxu0 0.0
      %160 = vmatpush.msra.mxu0 0.0
      %161 = vmatpush.msra.mxu0 0.0
      %162 = vmatpush.msra.mxu0 0.0
      %163 = vmatpush.msra.mxu0 0.0
      %164 = vmatpush.msra.mxu0 0.0
      %165 = vmatpush.msra.mxu0 0.0
      %166 = vmatpush.msra.mxu0 0.0
      %167 = vmatpush.msra.mxu0 0.0
      %168 = vmatpush.msra.mxu0 0.0
      %169 = vmatpush.msra.mxu0 0.0
      %170 = vmatpush.msra.mxu0 %v153
      %171 = vmatmul.f32.gmra.mxu0 %v146
      %v172 = vpop.f32.mrf.mxu0
      %v173 = vadd.f32 0.0, %v172
      %174 = vmatmul.f32.gmra.mxu0 %v149
      %v175 = vpop.f32.mrf.mxu0
      %v176 = vadd.f32 0.0, %v175
      %177 = vdwg.mxu0
      %v178 = vld [vmem:[#allocation2] sm:$0xff]
      %v179 = vld [vmem:[#allocation2 + $0x8] sm:$0xff]
      %v180 = vld [vmem:[%s2] sm:$0x1]
      %v182 = vperm.slane %v180, 0
      %v184 = vadd.f32 %v178, %v182
      %v185 = vadd.f32 %v179, %v182
      %v186 = vadd.f32 %v184, %v173
      %v187 = vadd.f32 %v185, %v176
      %188 = vst [vmem:[#allocation7] sm:$0xff] %v186
      %189 = vst [vmem:[#allocation7 + $0x8] sm:$0xff] %v187
    $region33: #{tpu_custom_call.1} parent=1 // pred_fallthru
      _
    // Predicated region
    $region34: #{tpu_custom_call.1} parent=1 // pred_check
      _
    $region35: #{tpu_custom_call.1} parent=1 // pred_check_branch
      %191 = sbr.rel (0) target = $region37
    $region36: #{tpu_custom_call.1} parent=1 // pred_region
      %193 = vsyncadd [#allocation6], 0
      %s194 = sshll.u32 [#allocation7], 4
      %s195 = int_to_ptr.vmem [resolvable:$true] %s194
      %s196 = sshll.u32 %s5, 4
      %s197 = int_to_ptr.hbm [resolvable:$true] %s196
      %202 = dma.vmem_to_hbm [thread:$0]  %s195, 256, %s197, [#allocation6], 128, 128, 8
    $region37: #{tpu_custom_call.1} parent=1 // pred_fallthru
      _
    // Predicated region
    $region38: #{tpu_custom_call.1} parent=1 // pred_check
      _
    $region39: #{tpu_custom_call.1} parent=1 // pred_check_branch
      %204 = sbr.rel (0) target = $region41
    $region40: #{tpu_custom_call.1} parent=1 // pred_region
      %206 = dma.done [#allocation6], 256
    $region41: #{tpu_custom_call.1} parent=1 // pred_fallthru
      _
    %207 = vsyncpa [#allocation5], 1
    %208 = vsyncpa [#allocation6], 1

</llo_original>
